<compile_context>
chip_gen: v7x
topology: tpu7x:2x2x1
jax: 0.10.0
libtpu: 0.0.40
codegen_flags: <defaults>
</compile_context>

<pallas_src>
import math
import jax
import jax.numpy as jnp
from jax.experimental import pallas as pl
from jax.experimental.pallas import tpu as pltpu


# --------------------------------------------------------------------------- kernels
def _adapter_math(x, wd, bd, wu, bu):
    # x:  (TM, D) native dtype
    # wd: (D, B)  native dtype        (down_proj weight, pre-transposed)
    # bd: (1, B)  float32
    # wu: (B, D)  native dtype        (up_proj weight, pre-transposed, scale folded in)
    # bu: (1, D)  float32             (scale folded in)
    down = jnp.dot(x, wd, preferred_element_type=jnp.float32) + bd
    down = jnp.maximum(down, 0.0)
    # TODO(synk): dropout with p>0 (training mode) not implemented — module default p=0.0.
    up = jnp.dot(down.astype(x.dtype), wu, preferred_element_type=jnp.float32) + bu
    return up  # float32 (TM, D), already scaled


def adapter_kernel_res_is_x(x_ref, wd_ref, bd_ref, wu_ref, bu_ref, out_ref):
    # Default path (residual is None): residual == x, reuse the already-loaded tile.
    x = x_ref[...]
    up = _adapter_math(x, wd_ref[...], bd_ref[...], wu_ref[...], bu_ref[...])
    out_ref[...] = (up + x.astype(jnp.float32)).astype(out_ref.dtype)


def adapter_kernel_with_res(x_ref, wd_ref, bd_ref, wu_ref, bu_ref, res_ref, out_ref):
    up = _adapter_math(x_ref[...], wd_ref[...], bd_ref[...], wu_ref[...], bu_ref[...])
    out_ref[...] = (up + res_ref[...].astype(jnp.float32)).astype(out_ref.dtype)


def adapter_kernel_no_res(x_ref, wd_ref, bd_ref, wu_ref, bu_ref, out_ref):
    up = _adapter_math(x_ref[...], wd_ref[...], bd_ref[...], wu_ref[...], bu_ref[...])
    out_ref[...] = up.astype(out_ref.dtype)


# --------------------------------------------------------------------------- sizing
def _round_up(v, m):
    return ((v + m - 1) // m) * m


def _vmem_capacity_bytes():
    """Physical VMEM for the current generation (v5e/v6e: 128 MiB, v7x: 64 MiB per TC)."""
    try:
        cap = int(getattr(pltpu.get_tpu_info(), "vmem_capacity_bytes", 0))
        if cap > 0:
            return cap
    except Exception:
        pass
    return 64 << 20  # conservative default (v7x per-TensorCore)


def _pick_tm(M, d_model, bottleneck, stream_bpe_total, weight_bpe):
    """Row-tile size from the VMEM budget:
       tm ~ (budget - resident weights) / (2 * per-row stream bytes + f32 temps)."""
    vmem_phys = _vmem_capacity_bytes()
    # ~60% of physical on 64 MiB chips (v7x), ~75% on 128 MiB chips (v5e/v6e);
    # the rest is headroom for Mosaic scratch / spills.
    frac = 0.60 if vmem_phys <= (64 << 20) else 0.75
    budget = int(vmem_phys * frac)
    # Resident weights (count 2 buffers each, conservative) + biases.
    fixed = 4 * d_model * bottleneck * weight_bpe + 8 * (d_model + bottleneck)
    # Per-row bytes: double-buffered streams + f32 epilogue/intermediate temps.
    per_row = 2 * d_model * stream_bpe_total + 4 * (2 * d_model + bottleneck)
    tm = max(8, (budget - fixed) // max(per_row, 1))
    tm = max(8, min((tm // 8) * 8, 2048))
    # Never larger than the (8-aligned) problem size.
    tm = min(tm, _round_up(M, 8))
    # Guarantee >= 2 grid steps so ("parallel",) spans both v7x TensorCores.
    if M >= 16:
        tm = min(tm, _round_up(-(-M // 2), 8))
    return max(8, tm), vmem_phys


def _vmem_limit(tm, d_model, bottleneck, stream_bpe_total, weight_bpe, vmem_phys):
    est = (2 * tm * d_model * stream_bpe_total                 # double-buffered row streams
           + 4 * d_model * bottleneck * weight_bpe             # resident weights (2 bufs each)
           + 8 * (d_model + bottleneck)                        # biases
           + tm * (2 * d_model + bottleneck) * 4)              # f32 temps
    return int(min(vmem_phys, max(int(est * 1.5), 16 << 20)))


# --------------------------------------------------------------------------- wrappers
def prepare_adapter_params(wd, bd, wu, bu, *, scale=0.1, compute_dtype=jnp.float32):
    """One-time weight prep (hoisted out of the per-call path): transpose to matmul layout,
    fold `scale` into the up_proj weight/bias, cast weights to the matmul compute dtype.

    wd: [bottleneck, d_model], bd: [bottleneck], wu: [d_model, bottleneck], bu: [d_model]
    (PyTorch nn.Linear layouts). Note: folding scale before a bf16 cast changes rounding
    order slightly vs. matmul-then-scale; within typical tolerances."""
    bottleneck, d_model = wd.shape
    wd_t = wd.T.astype(compute_dtype)                                 # (D, B)
    wu_t = (wu.T.astype(jnp.float32) * scale).astype(compute_dtype)   # (B, D), scale folded
    bd2 = bd.astype(jnp.float32).reshape(1, bottleneck)
    bu2 = (bu.astype(jnp.float32) * scale).reshape(1, d_model)
    return wd_t, bd2, wu_t, bu2


def adapter_apply(x, prepared, *, add_residual=True, residual=None, tm=None):
    """x: [batch, seq, d_model]; prepared = prepare_adapter_params(...).
    Matches Adapter.forward with adapter_layernorm_option='none', dropout p=0.0."""
    # TODO(synk): adapter_layernorm_option='in'/'out' (LayerNorm) not implemented — default 'none'.
    wd_t, bd2, wu_t, bu2 = prepared
    batch, seq, d_model = x.shape
    bottleneck = wd_t.shape[1]
    M = batch * seq
    dtype = x.dtype
    bpe = jnp.dtype(dtype).itemsize
    weight_bpe = jnp.dtype(wd_t.dtype).itemsize

    use_res_stream = add_residual and (residual is not None)
    res_bpe = jnp.dtype(residual.dtype).itemsize if use_res_stream else 0
    stream_bpe_total = 2 * bpe + res_bpe          # x read + out write (+ residual read)

    if tm is None:
        tm, vmem_phys = _pick_tm(M, d_model, bottleneck, stream_bpe_total, weight_bpe)
    else:
        tm = max(8, _round_up(tm, 8))
        vmem_phys = _vmem_capacity_bytes()

    # Ragged M: no wrapper-side pad/slice — Pallas masks the partial last tile's writeback,
    # and rows are independent so the garbage tail of the last input tile cannot contaminate
    # valid rows.
    grid = (pl.cdiv(M, tm),)
    x2 = x.reshape(M, d_model)

    row_spec = pl.BlockSpec((tm, d_model), lambda i: (i, 0))
    wd_spec = pl.BlockSpec((d_model, bottleneck), lambda i: (0, 0))
    bd_spec = pl.BlockSpec((1, bottleneck), lambda i: (0, 0))
    wu_spec = pl.BlockSpec((bottleneck, d_model), lambda i: (0, 0))
    bu_spec = pl.BlockSpec((1, d_model), lambda i: (0, 0))

    cparams = pltpu.CompilerParams(
        dimension_semantics=("parallel",),   # independent row tiles -> megacore on v7x
        vmem_limit_bytes=_vmem_limit(tm, d_model, bottleneck, stream_bpe_total,
                                     weight_bpe, vmem_phys),
    )
    cost = pl.CostEstimate(
        flops=4 * M * d_model * bottleneck,
        transcendentals=0,
        bytes_accessed=(M * d_model * stream_bpe_total
                        + 2 * d_model * bottleneck * weight_bpe
                        + 4 * (d_model + bottleneck)),
    )
    out_shape = jax.ShapeDtypeStruct((M, d_model), dtype)

    if add_residual and residual is None:
        out2 = pl.pallas_call(
            adapter_kernel_res_is_x, out_shape=out_shape, grid=grid,
            in_specs=[row_spec, wd_spec, bd_spec, wu_spec, bu_spec],
            out_specs=row_spec, compiler_params=cparams, cost_estimate=cost,
        )(x2, wd_t, bd2, wu_t, bu2)
    elif add_residual:
        res2 = residual.reshape(M, d_model)
        out2 = pl.pallas_call(
            adapter_kernel_with_res, out_shape=out_shape, grid=grid,
            in_specs=[row_spec, wd_spec, bd_spec, wu_spec, bu_spec, row_spec],
            out_specs=row_spec, compiler_params=cparams, cost_estimate=cost,
        )(x2, wd_t, bd2, wu_t, bu2, res2)
    else:
        # Module semantics: a provided `residual` is ignored when add_residual=False.
        out2 = pl.pallas_call(
            adapter_kernel_no_res, out_shape=out_shape, grid=grid,
            in_specs=[row_spec, wd_spec, bd_spec, wu_spec, bu_spec],
            out_specs=row_spec, compiler_params=cparams, cost_estimate=cost,
        )(x2, wd_t, bd2, wu_t, bu2)

    return out2.reshape(batch, seq, d_model)


def adapter_forward(x, wd, bd, wu, bu, *, scale=0.1, add_residual=True, residual=None,
                    tm=None):
    """Convenience wrapper (prepares params per call). Prefer prepare_adapter_params()
    + adapter_apply() to hoist the weight prep out of the per-call path."""
    prepared = prepare_adapter_params(wd, bd, wu, bu, scale=scale, compute_dtype=x.dtype)
    return adapter_apply(x, prepared, add_residual=add_residual, residual=residual, tm=tm)


def init_adapter_params(key, d_model, bottleneck):
    """Matches Adapter._reset_parameters with init_option='lora':
    kaiming_uniform_(down_proj.weight, a=sqrt(5)); zeros elsewhere."""
    fan_in = d_model
    bound = 1.0 / math.sqrt(fan_in)   # kaiming_uniform with a=sqrt(5) -> 1/sqrt(fan_in)
    wd = jax.random.uniform(key, (bottleneck, d_model), jnp.float32,
                            minval=-bound, maxval=bound)    # down_proj.weight (out, in)
    bd = jnp.zeros((bottleneck,), jnp.float32)              # down_proj.bias
    wu = jnp.zeros((d_model, bottleneck), jnp.float32)      # up_proj.weight (zeros, lora)
    bu = jnp.zeros((d_model,), jnp.float32)                 # up_proj.bias
    return wd, bd, wu, bu


# --------------------------------------------------------------------------- self-test
if __name__ == "__main__":
    key = jax.random.PRNGKey(0)
    kx, k1, k2, k3, k4, kr = jax.random.split(key, 6)

    batch, seq, d_model, bottleneck = 2, 8, 128, 32
    scale = 0.1  # adapter_scalar='0.1'

    x = jax.random.normal(kx, (batch, seq, d_model), jnp.float32)
    # Random (non-lora) weights so the numeric check is non-trivial.
    wd = jax.random.normal(k1, (bottleneck, d_model), jnp.float32) * 0.05
    bd = jax.random.normal(k2, (bottleneck,), jnp.float32) * 0.05
    wu = jax.random.normal(k3, (d_model, bottleneck), jnp.float32) * 0.05
    bu = jax.random.normal(k4, (d_model,), jnp.float32) * 0.05

    def ref_fn(xin, residual=None, add_residual=True):
        res = xin if residual is None else residual
        down = jnp.maximum(xin @ wd.T + bd, 0.0)
        up = (down @ wu.T + bu) * scale
        return up + res if add_residual else up

    # Hoisted one-time weight prep (recommended path).
    prepared = prepare_adapter_params(wd, bd, wu, bu, scale=scale, compute_dtype=x.dtype)

    # 1) default path: residual == x (single x stream), jit'd with prepared weights
    fwd = jax.jit(lambda xin: adapter_apply(xin, prepared))
    out = jax.block_until_ready(fwd(x))
    assert out.shape == x.shape
    assert jnp.allclose(out, ref_fn(x), atol=1e-4, rtol=1e-4)

    # 2) explicit residual
    res = jax.random.normal(kr, x.shape, jnp.float32)
    out2 = jax.block_until_ready(adapter_apply(x, prepared, residual=res))
    assert jnp.allclose(out2, ref_fn(x, residual=res), atol=1e-4, rtol=1e-4)

    # 3) no residual add (no residual stream at all)
    out3 = jax.block_until_ready(adapter_apply(x, prepared, add_residual=False))
    assert jnp.allclose(out3, ref_fn(x, add_residual=False), atol=1e-4, rtol=1e-4)

    # 4) ragged M (exercises the partial-last-tile masked writeback: M=14, no pad/slice)
    xr = jax.random.normal(kx, (2, 7, d_model), jnp.float32)
    outr = jax.block_until_ready(adapter_apply(xr, prepared))
    assert jnp.allclose(outr, ref_fn(xr), atol=1e-4, rtol=1e-4)

    # 5) lora init (up_proj zeros) -> output == x
    wd0, bd0, wu0, bu0 = init_adapter_params(k1, d_model, bottleneck)
    out0 = jax.block_until_ready(adapter_forward(x, wd0, bd0, wu0, bu0, scale=scale))
    assert jnp.allclose(out0, x, atol=1e-6)

    # 6) bf16 end-to-end (halves the HBM streams; f32 accumulation inside the kernel)
    xb = x.astype(jnp.bfloat16)
    prepared_bf16 = prepare_adapter_params(wd, bd, wu, bu, scale=scale,
                                           compute_dtype=jnp.bfloat16)
    outb = jax.block_until_ready(adapter_apply(xb, prepared_bf16))
    assert outb.dtype == jnp.bfloat16
    assert jnp.allclose(outb.astype(jnp.float32), ref_fn(x), atol=5e-2, rtol=5e-2)

    print("KERNEL_OK")
</pallas_src>

<mosaic_0001>
module attributes {stable_mosaic.version = 11 : i64} {
  func.func @adapter_kernel_res_is_x(%arg0: i32, %arg1: memref<8x128xf32, #tpu.memory_space<vmem>>, %arg2: memref<128x32xf32, #tpu.memory_space<vmem>>, %arg3: memref<1x32xf32, #tpu.memory_space<vmem>>, %arg4: memref<32x128xf32, #tpu.memory_space<vmem>>, %arg5: memref<1x128xf32, #tpu.memory_space<vmem>>, %arg6: memref<8x128xf32, #tpu.memory_space<vmem>>) attributes {dimension_semantics = [#tpu.dimension_semantics<parallel>], iteration_bounds = array<i64: 2>, scalar_prefetch = 0 : i64, scratch_operands = 0 : i64, tpu.core_type = #tpu.core_type<tc>, window_params = [{transform_indices = @transform_0, window_bounds = array<i64: 8, 128>}, {pipeline_mode = #tpu.pipeline_mode<synchronous>, transform_indices = @transform_1, window_bounds = array<i64: 128, 32>}, {pipeline_mode = #tpu.pipeline_mode<synchronous>, transform_indices = @transform_2, window_bounds = array<i64: 1, 32>}, {pipeline_mode = #tpu.pipeline_mode<synchronous>, transform_indices = @transform_3, window_bounds = array<i64: 32, 128>}, {pipeline_mode = #tpu.pipeline_mode<synchronous>, transform_indices = @transform_4, window_bounds = array<i64: 1, 128>}, {transform_indices = @transform_5, window_bounds = array<i64: 8, 128>}]} {
    %c0 = arith.constant 0 : index
    %c0_0 = arith.constant 0 : index
    %0 = vector.load %arg1[%c0, %c0_0] : memref<8x128xf32, #tpu.memory_space<vmem>>, vector<8x128xf32>
    %c0_1 = arith.constant 0 : index
    %c0_2 = arith.constant 0 : index
    %1 = vector.load %arg2[%c0_1, %c0_2] : memref<128x32xf32, #tpu.memory_space<vmem>>, vector<128x32xf32>
    %c0_3 = arith.constant 0 : index
    %c0_4 = arith.constant 0 : index
    %2 = vector.load %arg3[%c0_3, %c0_4] : memref<1x32xf32, #tpu.memory_space<vmem>>, vector<1x32xf32>
    %c0_5 = arith.constant 0 : index
    %c0_6 = arith.constant 0 : index
    %3 = vector.load %arg4[%c0_5, %c0_6] : memref<32x128xf32, #tpu.memory_space<vmem>>, vector<32x128xf32>
    %c0_7 = arith.constant 0 : index
    %c0_8 = arith.constant 0 : index
    %4 = vector.load %arg5[%c0_7, %c0_8] : memref<1x128xf32, #tpu.memory_space<vmem>>, vector<1x128xf32>
    %cst = arith.constant dense<0.000000e+00> : vector<8x32xf32>
    %5 = tpu.matmul %0, %1, %cst {dimension_numbers = #tpu.dot_dimension_numbers<[1], [0], [0], [1], [0, 0, 1, 1], [], []>} : vector<8x128xf32>, vector<128x32xf32>, vector<8x32xf32> -> vector<8x32xf32>
    %6 = vector.broadcast %2 : vector<1x32xf32> to vector<8x32xf32>
    %7 = arith.addf %5, %6 : vector<8x32xf32>
    %cst_9 = arith.constant 0.000000e+00 : f32
    %8 = vector.broadcast %cst_9 : f32 to vector<8x32xf32>
    %9 = arith.maximumf %7, %8 : vector<8x32xf32>
    %cst_10 = arith.constant dense<0.000000e+00> : vector<8x128xf32>
    %10 = tpu.matmul %9, %3, %cst_10 {dimension_numbers = #tpu.dot_dimension_numbers<[1], [0], [0], [1], [0, 0, 1, 1], [], []>} : vector<8x32xf32>, vector<32x128xf32>, vector<8x128xf32> -> vector<8x128xf32>
    %11 = vector.broadcast %4 : vector<1x128xf32> to vector<8x128xf32>
    %12 = arith.addf %10, %11 : vector<8x128xf32>
    %13 = arith.addf %12, %0 : vector<8x128xf32>
    %c0_11 = arith.constant 0 : index
    %c0_12 = arith.constant 0 : index
    %14 = vector.load %arg6[%c0_11, %c0_12] : memref<8x128xf32, #tpu.memory_space<vmem>>, vector<8x128xf32>
    tpu.vector_store %arg6[%c0_11, %c0_12], %13 {strides = array<i32>} : memref<8x128xf32, #tpu.memory_space<vmem>>, vector<8x128xf32>,
    return
  }
  func.func @transform_0(%arg0: i32) -> (i32, i32) {
    %c0_i32 = arith.constant 0 : i32
    %c0_i32_0 = arith.constant 0 : i32
    return %arg0, %c0_i32 : i32, i32
  }
  func.func @transform_1(%arg0: i32) -> (i32, i32) {
    %c0_i32 = arith.constant 0 : i32
    %c0_i32_0 = arith.constant 0 : i32
    %c0_i32_1 = arith.constant 0 : i32
    return %c0_i32, %c0_i32_0 : i32, i32
  }
  func.func @transform_2(%arg0: i32) -> (i32, i32) {
    %c0_i32 = arith.constant 0 : i32
    %c0_i32_0 = arith.constant 0 : i32
    %c0_i32_1 = arith.constant 0 : i32
    return %c0_i32, %c0_i32_0 : i32, i32
  }
  func.func @transform_3(%arg0: i32) -> (i32, i32) {
    %c0_i32 = arith.constant 0 : i32
    %c0_i32_0 = arith.constant 0 : i32
    %c0_i32_1 = arith.constant 0 : i32
    return %c0_i32, %c0_i32_0 : i32, i32
  }
  func.func @transform_4(%arg0: i32) -> (i32, i32) {
    %c0_i32 = arith.constant 0 : i32
    %c0_i32_0 = arith.constant 0 : i32
    %c0_i32_1 = arith.constant 0 : i32
    return %c0_i32, %c0_i32_0 : i32, i32
  }
  func.func @transform_5(%arg0: i32) -> (i32, i32) {
    %c0_i32 = arith.constant 0 : i32
    %c0_i32_0 = arith.constant 0 : i32
    return %arg0, %c0_i32 : i32, i32
  }
}

</mosaic_0001>

<llo_original>
// kernel: _lambda_.1
$region0: #{_lambda_.1}
  #allocation0 [shape = 'u32[]', space=smem, size = 0x4, offset = 0x4, fixed_abs, tag = 'smem constant byte address 0x4 - core index']
  #allocation1 [shape = 'u32[144,128]{1,0:T(1,128)}', space=vmem, size = 0x12000, scoped, tag = 'internal scratch']
  %s0 = inlined_call_operand.hbm [shape: f32[16,128], index: 0, kind: input, shape index: {}]
  %s1 = inlined_call_operand.hbm [shape: f32[128,32], index: 1, kind: input, shape index: {}]
  %s2 = inlined_call_operand.vmem [shape: f32[1,32], index: 2, kind: input, shape index: {}]
  %s3 = inlined_call_operand.hbm [shape: f32[32,128], index: 3, kind: input, shape index: {}]
  %s4 = inlined_call_operand.vmem [shape: f32[1,128], index: 4, kind: input, shape index: {}]
  %s5 = inlined_call_operand.hbm [shape: f32[16,128], index: 5, kind: output, shape index: {}]
  %s6 = sld [smem:[#allocation0]]
  $region65: #{_lambda_.1} parent=0
    _
  %s8 = ssub.s32 1, %s6
  %s9 = scalar_select 0, %s8, %s6
  $region1: #{_lambda_.1} parent=0
    #allocation2 [shape = 'u8[8192]{0}', space=vmem, size = 0x2000, scoped, tag = 'input window, operand 0']
    #allocation3 [shape = 's32[2]{0}', space=sflag, size = 0x8, scoped, tag = 'scoped memory for _lambda_.1']
    #allocation4 [shape = 's32[2]{0}', space=sflag, size = 0x8, scoped, tag = 'scoped memory for _lambda_.1']
    #allocation5 [shape = 'u8[65536]{0}', space=vmem, size = 0x10000, scoped, tag = 'input window, operand 1, single buffered']
    #allocation6 [shape = 's32[1]{0}', space=sflag, size = 0x4, scoped, tag = 'scoped memory for _lambda_.1']
    #allocation7 [shape = 'u8[16384]{0}', space=vmem, size = 0x4000, scoped, tag = 'input window, operand 3, single buffered']
    #allocation8 [shape = 'u8[8192]{0}', space=vmem, size = 0x2000, scoped, tag = 'output window, operand 0']
    %10 = vsyncpa [#allocation3], 0
    %s11 = scalar_lea.sflag [#allocation3], 1
    %12 = vsyncpa %s11, 0
    %13 = vsyncpa [#allocation6], 0
    %14 = vsyncpa [#allocation4], 0
    %s15 = scalar_lea.sflag [#allocation4], 1
    %16 = vsyncpa %s15, 0
    loop: start=0, step=1, limit=4
    $region2: #{_lambda_.1} parent=1 // loop_pre_header
      _
    $region3: #{_lambda_.1} parent=1 // loop_header
      %s18 = sphi 0, %s22
      %p19 = scmp.ge.s32.totalorder %s18, 4
      %s28 = sphi 0, %s30
      %s31 = sphi 0, %s28
      %s32 = sphi 0, %s31
      %s48 = sphi 0, %s32
      %s52 = sphi 0, %s52
      %s54 = sphi 0, %s52
      %s55 = sphi 0, %s54
      %s69 = sphi 0, %s55
      %s73 = sphi 0, %s73
      %s75 = sphi 0, %s73
      %s76 = sphi 0, %s75
      %s90 = sphi 0, %s76
      %s94 = sphi 0, %s94
      %s96 = sphi 0, %s94
      %s97 = sphi 0, %s96
      %s111 = sphi 0, %s97
      %s115 = sphi 0, %s115
      %s117 = sphi 0, %s115
      %s118 = sphi 0, %s117
      %s132 = sphi 0, %s118
      %s138 = sphi 0, %s140
      %s141 = sphi 0, %s138
      %s142 = sphi 0, %s141
      %s158 = sphi 0, %s142
    $region4: #{_lambda_.1} parent=1 // loop_header_branch
      %21 = sbr.rel (%p19) target = $region8
    $region5: #{_lambda_.1} parent=1 // loop_body
      %s23 = ssub.s32 %s18, 1
      %s24 = ssub.s32 %s18, 2
      %s25 = sadd.s32 %s18, 1
      %s26 = ssub.s32 %s18, %s25
      %p27 = scmp.eq.s32.totalorder %s26, 0
      %s29 = sadd.s32 %s28, 1
      %s30 = scalar_select %p27, %s28, %s29
      %p33 = pneg %p27
      %p34 = scmp.eq.s32.totalorder %s18, 1
      %p35 = por %p33, %p34
      %p36 = scmp.ne.s32.totalorder %s28, %s31
      %p37 = scmp.eq.s32.totalorder %s18, 0
      %p38 = por %p36, %p37
      %p39 = scmp.ne.s32.totalorder %s28, %s31
      %p40 = scmp.eq.s32.totalorder %s23, 1
      %p41 = por %p39, %p40
      %p42 = scmp.ne.s32.totalorder %s31, %s32
      %p43 = scmp.eq.s32.totalorder %s23, 0
      %p44 = por %p42, %p43
      %p45 = scmp.ne.s32.totalorder %s31, %s32
      %p46 = scmp.eq.s32.totalorder %s24, 1
      %p47 = por %p45, %p46
      %p49 = scmp.ne.s32.totalorder %s32, %s48
      %p50 = scmp.eq.s32.totalorder %s24, 0
      %p51 = por %p49, %p50
      %s53 = sadd.s32 %s52, 1
      %p56 = scmp.eq.s32.totalorder %s18, 1
      %p57 = scmp.ne.s32.totalorder %s52, %s54
      %p58 = scmp.eq.s32.totalorder %s18, 0
      %p59 = por %p57, %p58
      %p60 = scmp.ne.s32.totalorder %s52, %s54
      %p61 = scmp.eq.s32.totalorder %s23, 1
      %p62 = por %p60, %p61
      %p63 = scmp.ne.s32.totalorder %s54, %s55
      %p64 = scmp.eq.s32.totalorder %s23, 0
      %p65 = por %p63, %p64
      %p66 = scmp.ne.s32.totalorder %s54, %s55
      %p67 = scmp.eq.s32.totalorder %s24, 1
      %p68 = por %p66, %p67
      %p70 = scmp.ne.s32.totalorder %s55, %s69
      %p71 = scmp.eq.s32.totalorder %s24, 0
      %p72 = por %p70, %p71
      %s74 = sadd.s32 %s73, 1
      %p77 = scmp.eq.s32.totalorder %s18, 1
      %p78 = scmp.ne.s32.totalorder %s73, %s75
      %p79 = scmp.eq.s32.totalorder %s18, 0
      %p80 = por %p78, %p79
      %p81 = scmp.ne.s32.totalorder %s73, %s75
      %p82 = scmp.eq.s32.totalorder %s23, 1
      %p83 = por %p81, %p82
      %p84 = scmp.ne.s32.totalorder %s75, %s76
      %p85 = scmp.eq.s32.totalorder %s23, 0
      %p86 = por %p84, %p85
      %p87 = scmp.ne.s32.totalorder %s75, %s76
      %p88 = scmp.eq.s32.totalorder %s24, 1
      %p89 = por %p87, %p88
      %p91 = scmp.ne.s32.totalorder %s76, %s90
      %p92 = scmp.eq.s32.totalorder %s24, 0
      %p93 = por %p91, %p92
      %s95 = sadd.s32 %s94, 1
      %p98 = scmp.eq.s32.totalorder %s18, 1
      %p99 = scmp.ne.s32.totalorder %s94, %s96
      %p100 = scmp.eq.s32.totalorder %s18, 0
      %p101 = por %p99, %p100
      %p102 = scmp.ne.s32.totalorder %s94, %s96
      %p103 = scmp.eq.s32.totalorder %s23, 1
      %p104 = por %p102, %p103
      %p105 = scmp.ne.s32.totalorder %s96, %s97
      %p106 = scmp.eq.s32.totalorder %s23, 0
      %p107 = por %p105, %p106
      %p108 = scmp.ne.s32.totalorder %s96, %s97
      %p109 = scmp.eq.s32.totalorder %s24, 1
      %p110 = por %p108, %p109
      %p112 = scmp.ne.s32.totalorder %s97, %s111
      %p113 = scmp.eq.s32.totalorder %s24, 0
      %p114 = por %p112, %p113
      %s116 = sadd.s32 %s115, 1
      %p119 = scmp.eq.s32.totalorder %s18, 1
      %p120 = scmp.ne.s32.totalorder %s115, %s117
      %p121 = scmp.eq.s32.totalorder %s18, 0
      %p122 = por %p120, %p121
      %p123 = scmp.ne.s32.totalorder %s115, %s117
      %p124 = scmp.eq.s32.totalorder %s23, 1
      %p125 = por %p123, %p124
      %p126 = scmp.ne.s32.totalorder %s117, %s118
      %p127 = scmp.eq.s32.totalorder %s23, 0
      %p128 = por %p126, %p127
      %p129 = scmp.ne.s32.totalorder %s117, %s118
      %p130 = scmp.eq.s32.totalorder %s24, 1
      %p131 = por %p129, %p130
      %p133 = scmp.ne.s32.totalorder %s118, %s132
      %p134 = scmp.eq.s32.totalorder %s24, 0
      %p135 = por %p133, %p134
      %s136 = ssub.s32 %s18, %s25
      %p137 = scmp.eq.s32.totalorder %s136, 0
      %s139 = sadd.s32 %s138, 1
      %s140 = scalar_select %p137, %s138, %s139
      %p143 = pneg %p137
      %p144 = scmp.eq.s32.totalorder %s18, 1
      %p145 = por %p143, %p144
      %p146 = scmp.ne.s32.totalorder %s138, %s141
      %p147 = scmp.eq.s32.totalorder %s18, 0
      %p148 = por %p146, %p147
      %p149 = scmp.ne.s32.totalorder %s138, %s141
      %p150 = scmp.eq.s32.totalorder %s23, 1
      %p151 = por %p149, %p150
      %p152 = scmp.ne.s32.totalorder %s141, %s142
      %p153 = scmp.eq.s32.totalorder %s23, 0
      %p154 = por %p152, %p153
      %p155 = scmp.ne.s32.totalorder %s141, %s142
      %p156 = scmp.eq.s32.totalorder %s24, 1
      %p157 = por %p155, %p156
      %p159 = scmp.ne.s32.totalorder %s142, %s158
      %p160 = scmp.eq.s32.totalorder %s24, 0
      %p161 = por %p159, %p160
      %p162 = scmp.le.s32.totalorder 1, %s18
      %p163 = scmp.lt.s32.totalorder %s18, 3
      %p164 = pnand %p162, %p163
      %p165 = pneg %p164
      // Predicated region
      $region9: #{_lambda_.1} parent=5 // pred_check
        _
      $region10: #{_lambda_.1} parent=5 // pred_check_branch
        %167 = sbr.rel (%p164) target = $region12
      $region11: #{_lambda_.1} parent=5 // pred_region
        %s168 = ssub.s32 %s18, 1
        // Predicated region
        $region13: #{_lambda_.1} parent=11 // pred_check
          %p169 = pneg %p65
        $region14: #{_lambda_.1} parent=11 // pred_check_branch
          %171 = sbr.rel (%p169) target = $region16
        $region15: #{_lambda_.1} parent=11 // pred_region
          %s173 = ssub.s32 2048, 2048
          %174 = vsyncadd [#allocation6], %s173
          %s175 = sshll.u32 [#allocation5], 4
          %s176 = int_to_ptr.vmem [resolvable:$true] %s175
          %181 = dma.hbm_to_vmem [thread:$0]  %s1, 2048, %s176, [#allocation6], 128, 128, 8
        $region16: #{_lambda_.1} parent=11 // pred_fallthru
          _
        // Predicated region
        $region17: #{_lambda_.1} parent=11 // pred_check
          %p182 = pneg %p86
        $region18: #{_lambda_.1} parent=11 // pred_check_branch
          %184 = sbr.rel (%p182) target = $region20
        $region19: #{_lambda_.1} parent=11 // pred_region
          _
        $region20: #{_lambda_.1} parent=11 // pred_fallthru
          _
        // Predicated region
        $region21: #{_lambda_.1} parent=11 // pred_check
          %p185 = pneg %p107
        $region22: #{_lambda_.1} parent=11 // pred_check_branch
          %187 = sbr.rel (%p185) target = $region24
        $region23: #{_lambda_.1} parent=11 // pred_region
          %s189 = ssub.s32 512, 512
          %190 = vsyncadd [#allocation6], %s189
          %s191 = sshll.u32 [#allocation7], 4
          %s192 = int_to_ptr.vmem [resolvable:$true] %s191
          %197 = dma.hbm_to_vmem [thread:$0]  %s3, 512, %s192, [#allocation6], 128, 128, 8
        $region24: #{_lambda_.1} parent=11 // pred_fallthru
          _
        // Predicated region
        $region25: #{_lambda_.1} parent=11 // pred_check
          %p198 = pneg %p128
        $region26: #{_lambda_.1} parent=11 // pred_check_branch
          %200 = sbr.rel (%p198) target = $region28
        $region27: #{_lambda_.1} parent=11 // pred_region
          _
        $region28: #{_lambda_.1} parent=11 // pred_fallthru
          _
      $region12: #{_lambda_.1} parent=5 // pred_fallthru
        _
      %p201 = scmp.lt.s32.totalorder %s18, 2
      // Predicated region
      $region29: #{_lambda_.1} parent=5 // pred_check
        %p202 = pneg %p201
      $region30: #{_lambda_.1} parent=5 // pred_check_branch
        %204 = sbr.rel (%p202) target = $region32
      $region31: #{_lambda_.1} parent=5 // pred_region
        // Predicated region
        $region33: #{_lambda_.1} parent=31 // pred_check
          %p205 = pneg %p38
        $region34: #{_lambda_.1} parent=31 // pred_check_branch
          %207 = sbr.rel (%p205) target = $region36
        $region35: #{_lambda_.1} parent=31 // pred_region
          %s208 = sand.u32 %s28, 1
          %s209 = scalar_lea.sflag [#allocation3], %s208
          %s210 = sand.u32 %s28, 1
          %s211 = smul.addr %s210, 8
          %s212 = scalar_lea.vmem [#allocation2], %s211
          %s214 = ssub.s32 128, 128
          %215 = vsyncadd %s209, %s214
          %s216 = smul.addr %s18, 128
          %s217 = scalar_lea.hbm %s0, %s216
          %s219 = sshll.u32 %s212, 4
          %s220 = int_to_ptr.vmem [resolvable:$true] %s219
          %222 = dma.hbm_to_vmem [thread:$0]  %s217, 128, %s220, %s209
        $region36: #{_lambda_.1} parent=31 // pred_fallthru
          _
      $region32: #{_lambda_.1} parent=5 // pred_fallthru
        _
      %p223 = scmp.le.s32.totalorder 1, %s18
      %p224 = scmp.lt.s32.totalorder %s18, 3
      %p225 = pnand %p223, %p224
      %p226 = pneg %p225
      // Predicated region
      $region37: #{_lambda_.1} parent=5 // pred_check
        _
      $region38: #{_lambda_.1} parent=5 // pred_check_branch
        %228 = sbr.rel (%p225) target = $region40
      $region39: #{_lambda_.1} parent=5 // pred_region
        %s229 = ssub.s32 %s18, 1
        %s230 = sand.u32 %s31, 1
        %s231 = scalar_lea.sflag [#allocation3], %s230
        %s232 = sand.u32 %s31, 1
        %s233 = smul.addr %s232, 8
        %s234 = scalar_lea.vmem [#allocation2], %s233
        // Predicated region
        $region41: #{_lambda_.1} parent=39 // pred_check
          %p235 = pneg %p44
        $region42: #{_lambda_.1} parent=39 // pred_check_branch
          %237 = sbr.rel (%p235) target = $region44
        $region43: #{_lambda_.1} parent=39 // pred_region
          %238 = dma.done %s231, 128
        $region44: #{_lambda_.1} parent=39 // pred_fallthru
          _
        // Predicated region
        $region45: #{_lambda_.1} parent=39 // pred_check
          %p239 = pneg %p65
        $region46: #{_lambda_.1} parent=39 // pred_check_branch
          %241 = sbr.rel (%p239) target = $region48
        $region47: #{_lambda_.1} parent=39 // pred_region
          %242 = dma.done [#allocation6], 2048
        $region48: #{_lambda_.1} parent=39 // pred_fallthru
          _
        // Predicated region
        $region49: #{_lambda_.1} parent=39 // pred_check
          %p243 = pneg %p107
        $region50: #{_lambda_.1} parent=39 // pred_check_branch
          %245 = sbr.rel (%p243) target = $region52
        $region51: #{_lambda_.1} parent=39 // pred_region
          %246 = dma.done [#allocation6], 512
        $region52: #{_lambda_.1} parent=39 // pred_fallthru
          _
        %s247 = sand.u32 %s31, 1
        %s248 = scalar_lea.sflag [#allocation3], %s247
        %s249 = sand.u32 %s31, 1
        %s250 = smul.addr %s249, 8
        %s251 = scalar_lea.vmem [#allocation2], %s250
        %p252 = pneg %p44
        %p253 = pneg %p41
        %p254 = pneg %p65
        %p255 = pneg %p62
        %p256 = pneg %p86
        %p257 = pneg %p83
        %p258 = pneg %p107
        %p259 = pneg %p104
        %p260 = pneg %p128
        %p261 = pneg %p125
        %p262 = pneg %p154
        %p263 = pneg %p151
        %s264 = sand.u32 %s141, 1
        %s265 = scalar_lea.sflag [#allocation4], %s264
        %s266 = sand.u32 %s141, 1
        %s267 = smul.addr %s266, 8
        %s268 = scalar_lea.vmem [#allocation8], %s267
        %v269 = vld [vmem:[%s234] sm:$0xff]
        %v270 = vld [vmem:[#allocation5] sm:$0xff]
        %v271 = vld [vmem:[#allocation5 + $0x8] sm:$0xff]
        %v272 = vld [vmem:[#allocation5 + $0x10] sm:$0xff]
        %v273 = vld [vmem:[#allocation5 + $0x18] sm:$0xff]
        %v274 = vld [vmem:[#allocation5 + $0x20] sm:$0xff]
        %v275 = vld [vmem:[#allocation5 + $0x28] sm:$0xff]
        %v276 = vld [vmem:[#allocation5 + $0x30] sm:$0xff]
        %v277 = vld [vmem:[#allocation5 + $0x38] sm:$0xff]
        %v278 = vld [vmem:[#allocation5 + $0x40] sm:$0xff]
        %v279 = vld [vmem:[#allocation5 + $0x48] sm:$0xff]
        %v280 = vld [vmem:[#allocation5 + $0x50] sm:$0xff]
        %v281 = vld [vmem:[#allocation5 + $0x58] sm:$0xff]
        %v282 = vld [vmem:[#allocation5 + $0x60] sm:$0xff]
        %v283 = vld [vmem:[#allocation5 + $0x68] sm:$0xff]
        %v284 = vld [vmem:[#allocation5 + $0x70] sm:$0xff]
        %v285 = vld [vmem:[#allocation5 + $0x78] sm:$0xff]
        %v286 = vld [vmem:[%s2] sm:$0x1]
        %v287 = vld [vmem:[#allocation7] sm:$0xff]
        %v288 = vld [vmem:[#allocation7 + $0x8] sm:$0xff]
        %v289 = vld [vmem:[#allocation7 + $0x10] sm:$0xff]
        %v290 = vld [vmem:[#allocation7 + $0x18] sm:$0xff]
        %v291 = vld [vmem:[%s4] sm:$0x1]
        %v293 = vlaneseq
        %v294 = vshrl.u32 %v293, 7
        %v295 = vsub.s32 0, %v294
        %v296 = vrot.slane %v286, %v295
        %298 = vmatprep.subr.mxu0 0.0
        %299 = vmatpush1.msra.mxu0 %v270
        %300 = vmatprep.subr.mxu0 0.0
        %301 = vmatpush1.msra.mxu0 %v271
        %302 = vmatprep.subr.mxu0 0.0
        %303 = vmatpush1.msra.mxu0 %v272
        %304 = vmatprep.subr.mxu0 0.0
        %305 = vmatpush1.msra.mxu0 %v273
        %306 = vmatprep.subr.mxu0 0.0
        %307 = vmatpush1.msra.mxu0 %v274
        %308 = vmatprep.subr.mxu0 0.0
        %309 = vmatpush1.msra.mxu0 %v275
        %310 = vmatprep.subr.mxu0 0.0
        %311 = vmatpush1.msra.mxu0 %v276
        %312 = vmatprep.subr.mxu0 0.0
        %313 = vmatpush1.msra.mxu0 %v277
        %314 = vmatprep.subr.mxu0 0.0
        %315 = vmatpush1.msra.mxu0 %v278
        %316 = vmatprep.subr.mxu0 0.0
        %317 = vmatpush1.msra.mxu0 %v279
        %318 = vmatprep.subr.mxu0 0.0
        %319 = vmatpush1.msra.mxu0 %v280
        %320 = vmatprep.subr.mxu0 0.0
        %321 = vmatpush1.msra.mxu0 %v281
        %322 = vmatprep.subr.mxu0 0.0
        %323 = vmatpush1.msra.mxu0 %v282
        %324 = vmatprep.subr.mxu0 0.0
        %325 = vmatpush1.msra.mxu0 %v283
        %326 = vmatprep.subr.mxu0 0.0
        %327 = vmatpush1.msra.mxu0 %v284
        %328 = vmatprep.subr.mxu0 0.0
        %329 = vmatpush1.msra.mxu0 %v285
        %330 = vmatprep.subr.mxu0 0.0
        %331 = vmatpush1.msra.mxu0 0.0
        %332 = vmatprep.subr.mxu0 0.0
        %333 = vmatpush1.msra.mxu0 0.0
        %334 = vmatprep.subr.mxu0 0.0
        %335 = vmatpush1.msra.mxu0 0.0
        %336 = vmatprep.subr.mxu0 0.0
        %337 = vmatpush1.msra.mxu0 0.0
        %338 = vmatprep.subr.mxu0 0.0
        %339 = vmatpush1.msra.mxu0 0.0
        %340 = vmatprep.subr.mxu0 0.0
        %341 = vmatpush1.msra.mxu0 0.0
        %342 = vmatprep.subr.mxu0 0.0
        %343 = vmatpush1.msra.mxu0 0.0
        %344 = vmatprep.subr.mxu0 0.0
        %345 = vmatpush1.msra.mxu0 0.0
        %346 = vmatprep.subr.mxu0 0.0
        %347 = vmatpush1.msra.mxu0 0.0
        %348 = vmatprep.subr.mxu0 0.0
        %349 = vmatpush1.msra.mxu0 0.0
        %350 = vmatprep.subr.mxu0 0.0
        %351 = vmatpush1.msra.mxu0 0.0
        %352 = vmatprep.subr.mxu0 0.0
        %353 = vmatpush1.msra.mxu0 0.0
        %354 = vmatprep.subr.mxu0 0.0
        %355 = vmatpush1.msra.mxu0 0.0
        %356 = vmatprep.subr.mxu0 0.0
        %357 = vmatpush1.msra.mxu0 0.0
        %358 = vmatprep.subr.mxu0 0.0
        %359 = vmatpush1.msra.mxu0 0.0
        %360 = vmatprep.subr.mxu0 0.0
        %361 = vmatpush1.msra.mxu0 0.0
        %362 = vmatprep.mubr.f32.mxu0 0.0
        %363 = vmatmul.mubr.f32.gmra.mrb[0].mxu0 %v269
        %v364 = vpop.f32.mrb[0].mxu0
        %v365 = vadd.f32 %v296, %v364
        %v366 = vpop.f32.mrb[0].mxu0
        %367 = vdwg.mxu0
        %v368 = vmax.f32 %v365, 0.0
        %v370 = vlaneseq
        %v371 = vshrl.u32 %v370, 7
        %v372 = vsub.s32 0, %v371
        %v373 = vrot.slane %v291, %v372
        %vm375 = vcmask 261120
        %v377 = vsel %vm375, %v368, 0
        %379 = vmatprep.subr.mxu0 0.0
        %380 = vmatpush1.msra.mxu0 %v287
        %381 = vmatprep.subr.mxu0 0.0
        %382 = vmatpush1.msra.mxu0 %v288
        %383 = vmatprep.subr.mxu0 0.0
        %384 = vmatpush1.msra.mxu0 %v289
        %385 = vmatprep.subr.mxu0 0.0
        %386 = vmatpush1.msra.mxu0 %v290
        %387 = vmatprep.subr.mxu0 0.0
        %388 = vmatpush1.msra.mxu0 0.0
        %389 = vmatprep.subr.mxu0 0.0
        %390 = vmatpush1.msra.mxu0 0.0
        %391 = vmatprep.subr.mxu0 0.0
        %392 = vmatpush1.msra.mxu0 0.0
        %393 = vmatprep.subr.mxu0 0.0
        %394 = vmatpush1.msra.mxu0 0.0
        %395 = vmatprep.subr.mxu0 0.0
        %396 = vmatpush1.msra.mxu0 0.0
        %397 = vmatprep.subr.mxu0 0.0
        %398 = vmatpush1.msra.mxu0 0.0
        %399 = vmatprep.subr.mxu0 0.0
        %400 = vmatpush1.msra.mxu0 0.0
        %401 = vmatprep.subr.mxu0 0.0
        %402 = vmatpush1.msra.mxu0 0.0
        %403 = vmatprep.subr.mxu0 0.0
        %404 = vmatpush1.msra.mxu0 0.0
        %405 = vmatprep.subr.mxu0 0.0
        %406 = vmatpush1.msra.mxu0 0.0
        %407 = vmatprep.subr.mxu0 0.0
        %408 = vmatpush1.msra.mxu0 0.0
        %409 = vmatprep.subr.mxu0 0.0
        %410 = vmatpush1.msra.mxu0 0.0
        %411 = vmatprep.subr.mxu0 0.0
        %412 = vmatpush1.msra.mxu0 0.0
        %413 = vmatprep.subr.mxu0 0.0
        %414 = vmatpush1.msra.mxu0 0.0
        %415 = vmatprep.subr.mxu0 0.0
        %416 = vmatpush1.msra.mxu0 0.0
        %417 = vmatprep.subr.mxu0 0.0
        %418 = vmatpush1.msra.mxu0 0.0
        %419 = vmatprep.subr.mxu0 0.0
        %420 = vmatpush1.msra.mxu0 0.0
        %421 = vmatprep.subr.mxu0 0.0
        %422 = vmatpush1.msra.mxu0 0.0
        %423 = vmatprep.subr.mxu0 0.0
        %424 = vmatpush1.msra.mxu0 0.0
        %425 = vmatprep.subr.mxu0 0.0
        %426 = vmatpush1.msra.mxu0 0.0
        %427 = vmatprep.subr.mxu0 0.0
        %428 = vmatpush1.msra.mxu0 0.0
        %429 = vmatprep.subr.mxu0 0.0
        %430 = vmatpush1.msra.mxu0 0.0
        %431 = vmatprep.subr.mxu0 0.0
        %432 = vmatpush1.msra.mxu0 0.0
        %433 = vmatprep.subr.mxu0 0.0
        %434 = vmatpush1.msra.mxu0 0.0
        %435 = vmatprep.subr.mxu0 0.0
        %436 = vmatpush1.msra.mxu0 0.0
        %437 = vmatprep.subr.mxu0 0.0
        %438 = vmatpush1.msra.mxu0 0.0
        %439 = vmatprep.subr.mxu0 0.0
        %440 = vmatpush1.msra.mxu0 0.0
        %441 = vmatprep.subr.mxu0 0.0
        %442 = vmatpush1.msra.mxu0 0.0
        %443 = vmatprep.mubr.f32.mxu0 0.0
        %444 = vmatmul.mubr.f32.gmra.mrb[0].mxu0 %v377
        %v445 = vpop.f32.mrb[0].mxu0
        %v446 = vadd.f32 %v373, %v445
        %v447 = vpop.f32.mrb[0].mxu0
        %448 = vdwg.mxu0
        %v449 = vadd.f32 %v446, %v269
        %450 = vst [vmem:[%s268] sm:$0xff] %v449
        %s451 = sand.u32 %s141, 1
        %s452 = scalar_lea.sflag [#allocation4], %s451
        %s453 = sand.u32 %s141, 1
        %s454 = smul.addr %s453, 8
        %s455 = scalar_lea.vmem [#allocation8], %s454
        // Predicated region
        $region53: #{_lambda_.1} parent=39 // pred_check
          %p456 = pneg %p151
        $region54: #{_lambda_.1} parent=39 // pred_check_branch
          %458 = sbr.rel (%p456) target = $region56
        $region55: #{_lambda_.1} parent=39 // pred_region
          %s460 = ssub.s32 128, 128
          %461 = vsyncadd %s452, %s460
          %s462 = smul.addr %s23, 128
          %s463 = scalar_lea.hbm %s5, %s462
          %s465 = sshll.u32 %s455, 4
          %s466 = int_to_ptr.vmem [resolvable:$true] %s465
          %468 = dma.vmem_to_hbm [thread:$0]  %s466, 128, %s463, %s452
        $region56: #{_lambda_.1} parent=39 // pred_fallthru
          _
      $region40: #{_lambda_.1} parent=5 // pred_fallthru
        _
      %p469 = scmp.le.s32.totalorder 2, %s18
      // Predicated region
      $region57: #{_lambda_.1} parent=5 // pred_check
        %p470 = pneg %p469
      $region58: #{_lambda_.1} parent=5 // pred_check_branch
        %472 = sbr.rel (%p470) target = $region60
      $region59: #{_lambda_.1} parent=5 // pred_region
        %s473 = ssub.s32 %s18, 2
        // Predicated region
        $region61: #{_lambda_.1} parent=59 // pred_check
          %p474 = pneg %p157
        $region62: #{_lambda_.1} parent=59 // pred_check_branch
          %476 = sbr.rel (%p474) target = $region64
        $region63: #{_lambda_.1} parent=59 // pred_region
          %s477 = sand.u32 %s142, 1
          %s478 = scalar_lea.sflag [#allocation4], %s477
          %s479 = sand.u32 %s142, 1
          %s480 = smul.addr %s479, 8
          %s481 = scalar_lea.vmem [#allocation8], %s480
          %482 = dma.done %s478, 128
        $region64: #{_lambda_.1} parent=59 // pred_fallthru
          _
      $region60: #{_lambda_.1} parent=5 // pred_fallthru
        _
    $region6: #{_lambda_.1} parent=1 // loop_footer
      %s22 = sadd.s32 1, %s18
    $region7: #{_lambda_.1} parent=1 // loop_footer_branch
      %17 = sbr.rel target = $region3
    $region8: #{_lambda_.1} parent=1 // loop_exit
      _
    %483 = vsyncpa [#allocation3], 1
    %s484 = scalar_lea.sflag [#allocation3], 1
    %485 = vsyncpa %s484, 1
    %486 = vsyncpa [#allocation6], 1
    %487 = vsyncpa [#allocation4], 1
    %s488 = scalar_lea.sflag [#allocation4], 1
    %489 = vsyncpa %s488, 1

</llo_original>
